<compile_context>
chip_gen: v6e
topology: v6e:2x2x1
jax: 0.10.0
libtpu: 0.0.40
codegen_flags: <defaults>
</compile_context>

<pallas_src>
import functools

import jax
import jax.numpy as jnp
from jax.experimental import pallas as pl
from jax.experimental.pallas import tpu as pltpu

# ---- model config (matches the PyTorch module) ------------------------------
INPUT_DIM = 130
HIDDEN = [128, 64, 32]
NUM_CLASS = 5
NUM_REG = 2
BN_EPS = 1e-5

HEAD_OUT = INPUT_DIM + NUM_CLASS + NUM_REG   # 137 real head lanes
HEAD_PAD = 256                               # lane-dense padded head width
CLS_BLOCK = 128                              # 128-lane block that contains the cls lanes


def _silu(x):
    return x * jax.nn.sigmoid(x)


def _round_up(a, b):
    return ((a + b - 1) // b) * b


# ------------------------------- kernel --------------------------------------
def mmlp_kernel(x_ref, w1_ref, w2_ref, w3_ref, wh_ref, bias_ref, out_ref):
    # bias blob (f32): row 0 = layer1, row 1 = layer2, row 2 = layer3, row 3 = fused heads
    bias = bias_ref[...]
    b1 = bias[0:1, : HIDDEN[0]]
    b2 = bias[1:2, : HIDDEN[1]]
    b3 = bias[2:3, : HIDDEN[2]]
    bh = bias[3:4, :]

    # cast after the VMEM load (no wrapper-side HBM astype pass)
    x = x_ref[...].astype(w1_ref.dtype)

    # layer 1: (Linear + folded BN) -> SiLU   (dropout = identity in eval)
    h = jnp.dot(x, w1_ref[...], preferred_element_type=jnp.float32) + b1
    h = _silu(h).astype(w2_ref.dtype)

    # layer 2
    h = jnp.dot(h, w2_ref[...], preferred_element_type=jnp.float32) + b2
    h = _silu(h).astype(w3_ref.dtype)

    # layer 3
    h = jnp.dot(h, w3_ref[...], preferred_element_type=jnp.float32) + b3
    h = _silu(h).astype(wh_ref.dtype)

    # fused heads: one lane-dense matmul (dec | cls | reg | zero-pad)
    head = jnp.dot(h, wh_ref[...], preferred_element_type=jnp.float32) + bh

    # first 128 lanes (pure decoder lanes) pass straight through
    lo = head[:, :CLS_BLOCK]
    # second 128-lane block holds dec[128:130], cls[130:135], reg[135:137], pad
    hi = head[:, CLS_BLOCK:]
    lane = jax.lax.broadcasted_iota(jnp.int32, hi.shape, 1) + CLS_BLOCK
    is_cls = (lane >= INPUT_DIM) & (lane < INPUT_DIM + NUM_CLASS)
    hi = jnp.where(is_cls, jax.nn.sigmoid(hi), hi)

    out_ref[:, :CLS_BLOCK] = lo.astype(out_ref.dtype)
    out_ref[:, CLS_BLOCK:] = hi.astype(out_ref.dtype)


# ------------------------------- params --------------------------------------
def init_params(key):
    """Raw, PyTorch-like parameters (Linear weights stored as [in, out])."""
    p = {}

    def linear(key, fan_in, fan_out):
        kw, kb = jax.random.split(key)
        bound = 1.0 / jnp.sqrt(fan_in)
        w = jax.random.uniform(kw, (fan_in, fan_out), jnp.float32, -bound, bound)
        b = jax.random.uniform(kb, (fan_out,), jnp.float32, -bound, bound)
        return w, b

    def bn(key, dim):
        kg, kb, km, kv = jax.random.split(key, 4)
        gamma = 1.0 + 0.1 * jax.random.normal(kg, (dim,), jnp.float32)
        beta = 0.1 * jax.random.normal(kb, (dim,), jnp.float32)
        mean = 0.1 * jax.random.normal(km, (dim,), jnp.float32)
        var = jnp.abs(1.0 + 0.1 * jax.random.normal(kv, (dim,), jnp.float32))
        return gamma, beta, mean, var

    keys = jax.random.split(key, 9)
    p["w1"], p["b1"] = linear(keys[0], INPUT_DIM, HIDDEN[0])
    p["g1"], p["be1"], p["m1"], p["v1"] = bn(keys[1], HIDDEN[0])
    p["w2"], p["b2"] = linear(keys[2], HIDDEN[0], HIDDEN[1])
    p["g2"], p["be2"], p["m2"], p["v2"] = bn(keys[3], HIDDEN[1])
    p["w3"], p["b3"] = linear(keys[4], HIDDEN[1], HIDDEN[2])
    p["g3"], p["be3"], p["m3"], p["v3"] = bn(keys[5], HIDDEN[2])
    p["wdec"], p["bdec"] = linear(keys[6], HIDDEN[2], INPUT_DIM)
    p["wcls"], p["bcls"] = linear(keys[7], HIDDEN[2], NUM_CLASS)
    p["wreg"], p["breg"] = linear(keys[8], HIDDEN[2], NUM_REG)
    return p


def prepare_kernel_params(p, dtype=jnp.bfloat16):
    """Fold BN into weights/biases, fuse heads, pack biases into one blob.

    bf16 weights (default) are the MXU-native path; pass dtype=jnp.float32 if
    cls-logit precision near sigmoid saturation matters more than speed.
    """

    def fold(w, b, gamma, beta, mean, var):
        scale = gamma / jnp.sqrt(var + BN_EPS)       # [out]
        shift = beta - mean * scale
        return w * scale[None, :], b * scale + shift

    w1, b1 = fold(p["w1"], p["b1"], p["g1"], p["be1"], p["m1"], p["v1"])
    w2, b2 = fold(p["w2"], p["b2"], p["g2"], p["be2"], p["m2"], p["v2"])
    w3, b3 = fold(p["w3"], p["b3"], p["g3"], p["be3"], p["m3"], p["v3"])

    wh = jnp.concatenate([p["wdec"], p["wcls"], p["wreg"]], axis=1)       # (32, 137)
    bh = jnp.concatenate([p["bdec"], p["bcls"], p["breg"]], axis=0)       # (137,)
    wh = jnp.pad(wh, ((0, 0), (0, HEAD_PAD - HEAD_OUT)))                  # (32, 256)
    bh = jnp.pad(bh, (0, HEAD_PAD - HEAD_OUT))                            # (256,)

    bias = jnp.zeros((8, HEAD_PAD), jnp.float32)                          # one DMA blob
    bias = bias.at[0, : HIDDEN[0]].set(b1)
    bias = bias.at[1, : HIDDEN[1]].set(b2)
    bias = bias.at[2, : HIDDEN[2]].set(b3)
    bias = bias.at[3, :].set(bh)

    weights = tuple(w.astype(dtype) for w in (w1, w2, w3, wh))
    return weights + (bias,)   # (w1, w2, w3, wh, bias)


def split_mmlp_outputs(fused):
    """Slice the fused (n, 256) output into (dec, cls, reg). Prefer indexing the
    fused buffer directly downstream; this helper exists for convenience/tests."""
    dec = fused[:, :INPUT_DIM]
    cls = fused[:, INPUT_DIM: INPUT_DIM + NUM_CLASS]
    reg = fused[:, INPUT_DIM + NUM_CLASS: HEAD_OUT]
    return dec, cls, reg


def _choose_tile(n, tile_n):
    """Multiple-of-8 batch tile; >= 2 grid steps when possible (v7x megacore)."""
    tile_n = min(tile_n, n)
    if n >= 16:
        tile_n = min(tile_n, pl.cdiv(n, 2))
    return max(8, _round_up(tile_n, 8))


# ------------------------------- wrapper --------------------------------------
@functools.partial(jax.jit, static_argnames=("tile_n", "out_dtype"))
def mmlp_forward(x, kernel_params, tile_n=2048, out_dtype=jnp.bfloat16):
    """Returns the fused (n, HEAD_PAD) head output:
       lanes [0:130) = decoder, [130:135) = sigmoid(cls), [135:137) = regression,
       [137:256) = zero padding."""
    w1, w2, w3, wh, bias = kernel_params
    n = x.shape[0]

    tile_n = _choose_tile(n, tile_n)
    grid = (pl.cdiv(n, tile_n),)
    const = lambda i: (0, 0)

    # VMEM budget: double-buffered x/out tiles + resident weights + f32 intermediates.
    x_item = jnp.dtype(x.dtype).itemsize
    out_item = jnp.dtype(out_dtype).itemsize
    w_bytes = sum(int(w.size) * jnp.dtype(w.dtype).itemsize for w in (w1, w2, w3, wh))
    w_bytes += int(bias.size) * jnp.dtype(bias.dtype).itemsize
    footprint = (
        2 * tile_n * INPUT_DIM * x_item          # double-buffered activation tile
        + 2 * tile_n * HEAD_PAD * out_item       # double-buffered output tile
        + w_bytes
        + 4 * tile_n * HIDDEN[0] * 4             # f32 intermediates headroom
        + (4 << 20)                              # compiler scratch headroom
    )
    vmem_limit = min(64 << 20, max(16 << 20, _round_up(footprint, 1 << 20)))

    flops = 2 * n * (INPUT_DIM * HIDDEN[0] + HIDDEN[0] * HIDDEN[1]
                     + HIDDEN[1] * HIDDEN[2] + HIDDEN[2] * HEAD_PAD)
    transcendentals = n * (HIDDEN[0] + HIDDEN[1] + HIDDEN[2] + CLS_BLOCK)
    bytes_accessed = n * (INPUT_DIM * x_item + HEAD_PAD * out_item) + w_bytes

    out = pl.pallas_call(
        mmlp_kernel,
        out_shape=jax.ShapeDtypeStruct((n, HEAD_PAD), out_dtype),
        grid=grid,
        in_specs=[
            pl.BlockSpec((tile_n, INPUT_DIM), lambda i: (i, 0)),  # activations: tiled
            pl.BlockSpec(w1.shape, const),                        # weights: VMEM-resident
            pl.BlockSpec(w2.shape, const),
            pl.BlockSpec(w3.shape, const),
            pl.BlockSpec(wh.shape, const),
            pl.BlockSpec(bias.shape, const),
        ],
        out_specs=pl.BlockSpec((tile_n, HEAD_PAD), lambda i: (i, 0)),
        compiler_params=pltpu.CompilerParams(
            dimension_semantics=("parallel",),   # v7x: shard batch axis over both TCs
            vmem_limit_bytes=int(vmem_limit),
        ),
        cost_estimate=pl.CostEstimate(
            flops=int(flops),
            transcendentals=int(transcendentals),
            bytes_accessed=int(bytes_accessed),
        ),
    )(x, w1, w2, w3, wh, bias)
    return out


# ------------------------------- reference ------------------------------------
def mmlp_reference(x, p):
    def bn(h, g, b, m, v):
        return (h - m) / jnp.sqrt(v + BN_EPS) * g + b

    h = _silu(bn(x @ p["w1"] + p["b1"], p["g1"], p["be1"], p["m1"], p["v1"]))
    h = _silu(bn(h @ p["w2"] + p["b2"], p["g2"], p["be2"], p["m2"], p["v2"]))
    h = _silu(bn(h @ p["w3"] + p["b3"], p["g3"], p["be3"], p["m3"], p["v3"]))
    dec = h @ p["wdec"] + p["bdec"]
    cls = jax.nn.sigmoid(h @ p["wcls"] + p["bcls"])
    reg = h @ p["wreg"] + p["breg"]
    return dec, cls, reg


# --------------------------------- main ----------------------------------------
if __name__ == "__main__":
    key = jax.random.PRNGKey(0)
    k_x, k_p = jax.random.split(key)

    batch = 64   # small, multiple of 8; gives a 2-step grid (both v7x cores active)
    x = jax.random.uniform(k_x, (batch, INPUT_DIM), jnp.float32)
    params = init_params(k_p)
    dec_ref, cls_ref, reg_ref = mmlp_reference(x, params)

    # default path: bf16 MXU operands, f32 accumulate, bf16 fused output
    kp_bf16 = prepare_kernel_params(params)                       # bf16 default
    fused = jax.block_until_ready(mmlp_forward(x, kp_bf16))
    assert fused.shape == (batch, HEAD_PAD)
    dec, cls, reg = split_mmlp_outputs(fused.astype(jnp.float32))
    assert dec.shape == (batch, INPUT_DIM)
    assert cls.shape == (batch, NUM_CLASS)
    assert reg.shape == (batch, NUM_REG)
    assert jnp.allclose(dec, dec_ref, atol=5e-2, rtol=5e-2)
    assert jnp.allclose(cls, cls_ref, atol=5e-2, rtol=5e-2)
    assert jnp.allclose(reg, reg_ref, atol=5e-2, rtol=5e-2)

    # f32 precision path (tight tolerance check of the exact semantics)
    kp_f32 = prepare_kernel_params(params, jnp.float32)
    fused32 = jax.block_until_ready(mmlp_forward(x, kp_f32, out_dtype=jnp.float32))
    dec32, cls32, reg32 = split_mmlp_outputs(fused32)
    assert jnp.allclose(dec32, dec_ref, atol=1e-4, rtol=1e-4)
    assert jnp.allclose(cls32, cls_ref, atol=1e-4, rtol=1e-4)
    assert jnp.allclose(reg32, reg_ref, atol=1e-4, rtol=1e-4)

    print("KERNEL_OK")
</pallas_src>

<mosaic_0001>
module attributes {stable_mosaic.version = 11 : i64} {
  func.func @mmlp_kernel(%arg0: i32, %arg1: memref<32x130xf32, #tpu.memory_space<vmem>>, %arg2: memref<130x128xbf16, #tpu.memory_space<vmem>>, %arg3: memref<128x64xbf16, #tpu.memory_space<vmem>>, %arg4: memref<64x32xbf16, #tpu.memory_space<vmem>>, %arg5: memref<32x256xbf16, #tpu.memory_space<vmem>>, %arg6: memref<8x256xf32, #tpu.memory_space<vmem>>, %arg7: memref<32x256xbf16, #tpu.memory_space<vmem>>) attributes {dimension_semantics = [#tpu.dimension_semantics<parallel>], iteration_bounds = array<i64: 2>, scalar_prefetch = 0 : i64, scratch_operands = 0 : i64, tpu.core_type = #tpu.core_type<tc>, window_params = [{transform_indices = @transform_0, window_bounds = array<i64: 32, 130>}, {pipeline_mode = #tpu.pipeline_mode<synchronous>, transform_indices = @transform_1, window_bounds = array<i64: 130, 128>}, {pipeline_mode = #tpu.pipeline_mode<synchronous>, transform_indices = @transform_2, window_bounds = array<i64: 128, 64>}, {pipeline_mode = #tpu.pipeline_mode<synchronous>, transform_indices = @transform_3, window_bounds = array<i64: 64, 32>}, {pipeline_mode = #tpu.pipeline_mode<synchronous>, transform_indices = @transform_4, window_bounds = array<i64: 32, 256>}, {pipeline_mode = #tpu.pipeline_mode<synchronous>, transform_indices = @transform_5, window_bounds = array<i64: 8, 256>}, {transform_indices = @transform_6, window_bounds = array<i64: 32, 256>}]} {
    %c0 = arith.constant 0 : index
    %c0_0 = arith.constant 0 : index
    %0 = vector.load %arg6[%c0, %c0_0] : memref<8x256xf32, #tpu.memory_space<vmem>>, vector<8x256xf32>
    %1 = vector.extract_strided_slice %0 {offsets = [0, 0], sizes = [1, 128], strides = [1, 1]} : vector<8x256xf32> to vector<1x128xf32>
    %2 = vector.extract_strided_slice %0 {offsets = [1, 0], sizes = [1, 64], strides = [1, 1]} : vector<8x256xf32> to vector<1x64xf32>
    %3 = vector.extract_strided_slice %0 {offsets = [2, 0], sizes = [1, 32], strides = [1, 1]} : vector<8x256xf32> to vector<1x32xf32>
    %4 = vector.extract_strided_slice %0 {offsets = [3, 0], sizes = [1, 256], strides = [1, 1]} : vector<8x256xf32> to vector<1x256xf32>
    %c0_1 = arith.constant 0 : index
    %c0_2 = arith.constant 0 : index
    %5 = vector.load %arg1[%c0_1, %c0_2] : memref<32x130xf32, #tpu.memory_space<vmem>>, vector<32x130xf32>
    %6 = arith.truncf %5 : vector<32x130xf32> to vector<32x130xbf16>
    %c0_3 = arith.constant 0 : index
    %c0_4 = arith.constant 0 : index
    %7 = vector.load %arg2[%c0_3, %c0_4] : memref<130x128xbf16, #tpu.memory_space<vmem>>, vector<130x128xbf16>
    %cst = arith.constant dense<0.000000e+00> : vector<32x128xf32>
    %8 = tpu.matmul %6, %7, %cst {dimension_numbers = #tpu.dot_dimension_numbers<[1], [0], [0], [1], [0, 0, 1, 1], [], []>} : vector<32x130xbf16>, vector<130x128xbf16>, vector<32x128xf32> -> vector<32x128xf32>
    %9 = vector.broadcast %1 : vector<1x128xf32> to vector<32x128xf32>
    %10 = arith.addf %8, %9 : vector<32x128xf32>
    %11 = arith.negf %10 : vector<32x128xf32>
    %12 = math.exp %11 : vector<32x128xf32>
    %cst_5 = arith.constant 1.000000e+00 : f32
    %13 = vector.broadcast %cst_5 : f32 to vector<32x128xf32>
    %14 = arith.addf %13, %12 : vector<32x128xf32>
    %15 = arith.divf %13, %14 : vector<32x128xf32>
    %16 = arith.mulf %10, %15 : vector<32x128xf32>
    %17 = arith.truncf %16 : vector<32x128xf32> to vector<32x128xbf16>
    %c0_6 = arith.constant 0 : index
    %c0_7 = arith.constant 0 : index
    %18 = vector.load %arg3[%c0_6, %c0_7] : memref<128x64xbf16, #tpu.memory_space<vmem>>, vector<128x64xbf16>
    %cst_8 = arith.constant dense<0.000000e+00> : vector<32x64xf32>
    %19 = tpu.matmul %17, %18, %cst_8 {dimension_numbers = #tpu.dot_dimension_numbers<[1], [0], [0], [1], [0, 0, 1, 1], [], []>} : vector<32x128xbf16>, vector<128x64xbf16>, vector<32x64xf32> -> vector<32x64xf32>
    %20 = vector.broadcast %2 : vector<1x64xf32> to vector<32x64xf32>
    %21 = arith.addf %19, %20 : vector<32x64xf32>
    %22 = arith.negf %21 : vector<32x64xf32>
    %23 = math.exp %22 : vector<32x64xf32>
    %cst_9 = arith.constant 1.000000e+00 : f32
    %24 = vector.broadcast %cst_9 : f32 to vector<32x64xf32>
    %25 = arith.addf %24, %23 : vector<32x64xf32>
    %26 = arith.divf %24, %25 : vector<32x64xf32>
    %27 = arith.mulf %21, %26 : vector<32x64xf32>
    %28 = arith.truncf %27 : vector<32x64xf32> to vector<32x64xbf16>
    %c0_10 = arith.constant 0 : index
    %c0_11 = arith.constant 0 : index
    %29 = vector.load %arg4[%c0_10, %c0_11] : memref<64x32xbf16, #tpu.memory_space<vmem>>, vector<64x32xbf16>
    %cst_12 = arith.constant dense<0.000000e+00> : vector<32x32xf32>
    %30 = tpu.matmul %28, %29, %cst_12 {dimension_numbers = #tpu.dot_dimension_numbers<[1], [0], [0], [1], [0, 0, 1, 1], [], []>} : vector<32x64xbf16>, vector<64x32xbf16>, vector<32x32xf32> -> vector<32x32xf32>
    %31 = vector.broadcast %3 : vector<1x32xf32> to vector<32x32xf32>
    %32 = arith.addf %30, %31 : vector<32x32xf32>
    %33 = arith.negf %32 : vector<32x32xf32>
    %34 = math.exp %33 : vector<32x32xf32>
    %cst_13 = arith.constant 1.000000e+00 : f32
    %35 = vector.broadcast %cst_13 : f32 to vector<32x32xf32>
    %36 = arith.addf %35, %34 : vector<32x32xf32>
    %37 = arith.divf %35, %36 : vector<32x32xf32>
    %38 = arith.mulf %32, %37 : vector<32x32xf32>
    %39 = arith.truncf %38 : vector<32x32xf32> to vector<32x32xbf16>
    %c0_14 = arith.constant 0 : index
    %c0_15 = arith.constant 0 : index
    %40 = vector.load %arg5[%c0_14, %c0_15] : memref<32x256xbf16, #tpu.memory_space<vmem>>, vector<32x256xbf16>
    %cst_16 = arith.constant dense<0.000000e+00> : vector<32x256xf32>
    %41 = tpu.matmul %39, %40, %cst_16 {dimension_numbers = #tpu.dot_dimension_numbers<[1], [0], [0], [1], [0, 0, 1, 1], [], []>} : vector<32x32xbf16>, vector<32x256xbf16>, vector<32x256xf32> -> vector<32x256xf32>
    %42 = vector.broadcast %4 : vector<1x256xf32> to vector<32x256xf32>
    %43 = arith.addf %41, %42 : vector<32x256xf32>
    %44 = vector.extract_strided_slice %43 {offsets = [0, 0], sizes = [32, 128], strides = [1, 1]} : vector<32x256xf32> to vector<32x128xf32>
    %45 = vector.extract_strided_slice %43 {offsets = [0, 128], sizes = [32, 128], strides = [1, 1]} : vector<32x256xf32> to vector<32x128xf32>
    %46 = tpu.iota {dimensions = array<i32: 1>} : vector<32x128xi32>
    %c128_i32 = arith.constant 128 : i32
    %47 = vector.broadcast %c128_i32 : i32 to vector<32x128xi32>
    %48 = arith.addi %46, %47 : vector<32x128xi32>
    %c130_i32 = arith.constant 130 : i32
    %49 = vector.broadcast %c130_i32 : i32 to vector<32x128xi32>
    %50 = arith.cmpi sge, %48, %49 : vector<32x128xi32>
    %c135_i32 = arith.constant 135 : i32
    %51 = vector.broadcast %c135_i32 : i32 to vector<32x128xi32>
    %52 = arith.cmpi slt, %48, %51 : vector<32x128xi32>
    %53 = arith.andi %50, %52 : vector<32x128xi1>
    %54 = arith.negf %45 : vector<32x128xf32>
    %55 = math.exp %54 : vector<32x128xf32>
    %cst_17 = arith.constant 1.000000e+00 : f32
    %56 = vector.broadcast %cst_17 : f32 to vector<32x128xf32>
    %57 = arith.addf %56, %55 : vector<32x128xf32>
    %58 = arith.divf %56, %57 : vector<32x128xf32>
    %59 = arith.select %53, %58, %45 : vector<32x128xi1>, vector<32x128xf32>
    %60 = arith.truncf %44 : vector<32x128xf32> to vector<32x128xbf16>
    %c0_18 = arith.constant 0 : index
    %c0_19 = arith.constant 0 : index
    %61 = vector.load %arg7[%c0_18, %c0_19] : memref<32x256xbf16, #tpu.memory_space<vmem>>, vector<32x128xbf16>
    tpu.vector_store %arg7[%c0_18, %c0_19], %60 {strides = array<i32>} : memref<32x256xbf16, #tpu.memory_space<vmem>>, vector<32x128xbf16>,
    %62 = arith.truncf %59 : vector<32x128xf32> to vector<32x128xbf16>
    %c0_20 = arith.constant 0 : index
    %c128 = arith.constant 128 : index
    %63 = vector.load %arg7[%c0_20, %c128] : memref<32x256xbf16, #tpu.memory_space<vmem>>, vector<32x128xbf16>
    tpu.vector_store %arg7[%c0_20, %c128], %62 {strides = array<i32>} : memref<32x256xbf16, #tpu.memory_space<vmem>>, vector<32x128xbf16>,
    return
  }
  func.func @transform_0(%arg0: i32) -> (i32, i32) {
    %c0_i32 = arith.constant 0 : i32
    %c0_i32_0 = arith.constant 0 : i32
    return %arg0, %c0_i32 : i32, i32
  }
  func.func @transform_1(%arg0: i32) -> (i32, i32) {
    %c0_i32 = arith.constant 0 : i32
    %c0_i32_0 = arith.constant 0 : i32
    %c0_i32_1 = arith.constant 0 : i32
    return %c0_i32, %c0_i32_0 : i32, i32
  }
  func.func @transform_2(%arg0: i32) -> (i32, i32) {
    %c0_i32 = arith.constant 0 : i32
    %c0_i32_0 = arith.constant 0 : i32
    %c0_i32_1 = arith.constant 0 : i32
    return %c0_i32, %c0_i32_0 : i32, i32
  }
  func.func @transform_3(%arg0: i32) -> (i32, i32) {
    %c0_i32 = arith.constant 0 : i32
    %c0_i32_0 = arith.constant 0 : i32
    %c0_i32_1 = arith.constant 0 : i32
    return %c0_i32, %c0_i32_0 : i32, i32
  }
  func.func @transform_4(%arg0: i32) -> (i32, i32) {
    %c0_i32 = arith.constant 0 : i32
    %c0_i32_0 = arith.constant 0 : i32
    %c0_i32_1 = arith.constant 0 : i32
    return %c0_i32, %c0_i32_0 : i32, i32
  }
  func.func @transform_5(%arg0: i32) -> (i32, i32) {
    %c0_i32 = arith.constant 0 : i32
    %c0_i32_0 = arith.constant 0 : i32
    %c0_i32_1 = arith.constant 0 : i32
    return %c0_i32, %c0_i32_0 : i32, i32
  }
  func.func @transform_6(%arg0: i32) -> (i32, i32) {
    %c0_i32 = arith.constant 0 : i32
    %c0_i32_0 = arith.constant 0 : i32
    return %arg0, %c0_i32 : i32, i32
  }
}

</mosaic_0001>

<llo_original>
// kernel: mmlp_forward.1
$region0: #{mmlp_forward.1}
  #allocation0 [shape = 'u32[]', space=smem, size = 0x4, offset = 0x4, fixed_abs, tag = 'smem constant byte address 0x4 - core index']
  #allocation1 [shape = 'u32[144,128]{1,0:T(1,128)}', space=vmem, size = 0x12000, scoped, tag = 'internal scratch']
  %s0 = inlined_call_operand.vmem [shape: f32[64,130], index: 0, kind: input, shape index: {}]
  %s1 = inlined_call_operand.hbm [shape: bf16[130,128], index: 1, kind: input, shape index: {}]
  %s2 = inlined_call_operand.vmem [shape: bf16[128,64], index: 2, kind: input, shape index: {}]
  %s3 = inlined_call_operand.vmem [shape: bf16[64,32], index: 3, kind: input, shape index: {}]
  %s4 = inlined_call_operand.hbm [shape: bf16[32,256], index: 4, kind: input, shape index: {}]
  %s5 = inlined_call_operand.vmem [shape: f32[8,256], index: 5, kind: input, shape index: {}]
  %s6 = inlined_call_operand.hbm [shape: bf16[64,256], index: 6, kind: output, shape index: {}]
  %s7 = sld [smem:[#allocation0]]
  $region65: #{mmlp_forward.1} parent=0
    _
  %s9 = ssub.s32 1, %s7
  %s10 = scalar_select 0, %s9, %s7
  $region1: #{mmlp_forward.1} parent=0
    #allocation2 [shape = 'u8[34816]{0}', space=vmem, size = 0x8800, scoped, tag = 'input window, operand 1, single buffered']
    #allocation3 [shape = 's32[2]{0}', space=sflag, size = 0x8, scoped, tag = 'scoped memory for mmlp_forward.1']
    #allocation4 [shape = 's32[2]{0}', space=sflag, size = 0x8, scoped, tag = 'scoped memory for mmlp_forward.1']
    #allocation5 [shape = 'u8[16384]{0}', space=vmem, size = 0x4000, scoped, tag = 'input window, operand 4, single buffered']
    #allocation6 [shape = 's32[1]{0}', space=sflag, size = 0x4, scoped, tag = 'scoped memory for mmlp_forward.1']
    #allocation7 [shape = 'u8[32768]{0}', space=vmem, size = 0x8000, scoped, tag = 'output window, operand 0']
    %11 = vsyncpa [#allocation3], 0
    %12 = vsyncpa [#allocation6], 0
    %13 = vsyncpa [#allocation4], 0
    %s14 = scalar_lea.sflag [#allocation4], 1
    %15 = vsyncpa %s14, 0
    loop: start=0, step=1, limit=4
    $region2: #{mmlp_forward.1} parent=1 // loop_pre_header
      _
    $region3: #{mmlp_forward.1} parent=1 // loop_header
      %s17 = sphi 0, %s21
      %p18 = scmp.ge.s32.totalorder %s17, 4
      %s27 = sphi 0, %s29
      %s30 = sphi 0, %s27
      %s31 = sphi 0, %s30
      %s47 = sphi 0, %s31
      %s51 = sphi 0, %s51
      %s53 = sphi 0, %s51
      %s54 = sphi 0, %s53
      %s68 = sphi 0, %s54
      %s72 = sphi 0, %s72
      %s74 = sphi 0, %s72
      %s75 = sphi 0, %s74
      %s89 = sphi 0, %s75
      %s93 = sphi 0, %s93
      %s95 = sphi 0, %s93
      %s96 = sphi 0, %s95
      %s110 = sphi 0, %s96
      %s114 = sphi 0, %s114
      %s116 = sphi 0, %s114
      %s117 = sphi 0, %s116
      %s131 = sphi 0, %s117
      %s135 = sphi 0, %s135
      %s137 = sphi 0, %s135
      %s138 = sphi 0, %s137
      %s152 = sphi 0, %s138
      %s158 = sphi 0, %s160
      %s161 = sphi 0, %s158
      %s162 = sphi 0, %s161
      %s178 = sphi 0, %s162
    $region4: #{mmlp_forward.1} parent=1 // loop_header_branch
      %20 = sbr.rel (%p18) target = $region8
    $region5: #{mmlp_forward.1} parent=1 // loop_body
      %s22 = ssub.s32 %s17, 1
      %s23 = ssub.s32 %s17, 2
      %s24 = sadd.s32 %s17, 1
      %s25 = ssub.s32 %s17, %s24
      %p26 = scmp.eq.s32.totalorder %s25, 0
      %s28 = sadd.s32 %s27, 1
      %s29 = scalar_select %p26, %s27, %s28
      %p32 = pneg %p26
      %p33 = scmp.eq.s32.totalorder %s17, 1
      %p34 = por %p32, %p33
      %p35 = scmp.ne.s32.totalorder %s27, %s30
      %p36 = scmp.eq.s32.totalorder %s17, 0
      %p37 = por %p35, %p36
      %p38 = scmp.ne.s32.totalorder %s27, %s30
      %p39 = scmp.eq.s32.totalorder %s22, 1
      %p40 = por %p38, %p39
      %p41 = scmp.ne.s32.totalorder %s30, %s31
      %p42 = scmp.eq.s32.totalorder %s22, 0
      %p43 = por %p41, %p42
      %p44 = scmp.ne.s32.totalorder %s30, %s31
      %p45 = scmp.eq.s32.totalorder %s23, 1
      %p46 = por %p44, %p45
      %p48 = scmp.ne.s32.totalorder %s31, %s47
      %p49 = scmp.eq.s32.totalorder %s23, 0
      %p50 = por %p48, %p49
      %s52 = sadd.s32 %s51, 1
      %p55 = scmp.eq.s32.totalorder %s17, 1
      %p56 = scmp.ne.s32.totalorder %s51, %s53
      %p57 = scmp.eq.s32.totalorder %s17, 0
      %p58 = por %p56, %p57
      %p59 = scmp.ne.s32.totalorder %s51, %s53
      %p60 = scmp.eq.s32.totalorder %s22, 1
      %p61 = por %p59, %p60
      %p62 = scmp.ne.s32.totalorder %s53, %s54
      %p63 = scmp.eq.s32.totalorder %s22, 0
      %p64 = por %p62, %p63
      %p65 = scmp.ne.s32.totalorder %s53, %s54
      %p66 = scmp.eq.s32.totalorder %s23, 1
      %p67 = por %p65, %p66
      %p69 = scmp.ne.s32.totalorder %s54, %s68
      %p70 = scmp.eq.s32.totalorder %s23, 0
      %p71 = por %p69, %p70
      %s73 = sadd.s32 %s72, 1
      %p76 = scmp.eq.s32.totalorder %s17, 1
      %p77 = scmp.ne.s32.totalorder %s72, %s74
      %p78 = scmp.eq.s32.totalorder %s17, 0
      %p79 = por %p77, %p78
      %p80 = scmp.ne.s32.totalorder %s72, %s74
      %p81 = scmp.eq.s32.totalorder %s22, 1
      %p82 = por %p80, %p81
      %p83 = scmp.ne.s32.totalorder %s74, %s75
      %p84 = scmp.eq.s32.totalorder %s22, 0
      %p85 = por %p83, %p84
      %p86 = scmp.ne.s32.totalorder %s74, %s75
      %p87 = scmp.eq.s32.totalorder %s23, 1
      %p88 = por %p86, %p87
      %p90 = scmp.ne.s32.totalorder %s75, %s89
      %p91 = scmp.eq.s32.totalorder %s23, 0
      %p92 = por %p90, %p91
      %s94 = sadd.s32 %s93, 1
      %p97 = scmp.eq.s32.totalorder %s17, 1
      %p98 = scmp.ne.s32.totalorder %s93, %s95
      %p99 = scmp.eq.s32.totalorder %s17, 0
      %p100 = por %p98, %p99
      %p101 = scmp.ne.s32.totalorder %s93, %s95
      %p102 = scmp.eq.s32.totalorder %s22, 1
      %p103 = por %p101, %p102
      %p104 = scmp.ne.s32.totalorder %s95, %s96
      %p105 = scmp.eq.s32.totalorder %s22, 0
      %p106 = por %p104, %p105
      %p107 = scmp.ne.s32.totalorder %s95, %s96
      %p108 = scmp.eq.s32.totalorder %s23, 1
      %p109 = por %p107, %p108
      %p111 = scmp.ne.s32.totalorder %s96, %s110
      %p112 = scmp.eq.s32.totalorder %s23, 0
      %p113 = por %p111, %p112
      %s115 = sadd.s32 %s114, 1
      %p118 = scmp.eq.s32.totalorder %s17, 1
      %p119 = scmp.ne.s32.totalorder %s114, %s116
      %p120 = scmp.eq.s32.totalorder %s17, 0
      %p121 = por %p119, %p120
      %p122 = scmp.ne.s32.totalorder %s114, %s116
      %p123 = scmp.eq.s32.totalorder %s22, 1
      %p124 = por %p122, %p123
      %p125 = scmp.ne.s32.totalorder %s116, %s117
      %p126 = scmp.eq.s32.totalorder %s22, 0
      %p127 = por %p125, %p126
      %p128 = scmp.ne.s32.totalorder %s116, %s117
      %p129 = scmp.eq.s32.totalorder %s23, 1
      %p130 = por %p128, %p129
      %p132 = scmp.ne.s32.totalorder %s117, %s131
      %p133 = scmp.eq.s32.totalorder %s23, 0
      %p134 = por %p132, %p133
      %s136 = sadd.s32 %s135, 1
      %p139 = scmp.eq.s32.totalorder %s17, 1
      %p140 = scmp.ne.s32.totalorder %s135, %s137
      %p141 = scmp.eq.s32.totalorder %s17, 0
      %p142 = por %p140, %p141
      %p143 = scmp.ne.s32.totalorder %s135, %s137
      %p144 = scmp.eq.s32.totalorder %s22, 1
      %p145 = por %p143, %p144
      %p146 = scmp.ne.s32.totalorder %s137, %s138
      %p147 = scmp.eq.s32.totalorder %s22, 0
      %p148 = por %p146, %p147
      %p149 = scmp.ne.s32.totalorder %s137, %s138
      %p150 = scmp.eq.s32.totalorder %s23, 1
      %p151 = por %p149, %p150
      %p153 = scmp.ne.s32.totalorder %s138, %s152
      %p154 = scmp.eq.s32.totalorder %s23, 0
      %p155 = por %p153, %p154
      %s156 = ssub.s32 %s17, %s24
      %p157 = scmp.eq.s32.totalorder %s156, 0
      %s159 = sadd.s32 %s158, 1
      %s160 = scalar_select %p157, %s158, %s159
      %p163 = pneg %p157
      %p164 = scmp.eq.s32.totalorder %s17, 1
      %p165 = por %p163, %p164
      %p166 = scmp.ne.s32.totalorder %s158, %s161
      %p167 = scmp.eq.s32.totalorder %s17, 0
      %p168 = por %p166, %p167
      %p169 = scmp.ne.s32.totalorder %s158, %s161
      %p170 = scmp.eq.s32.totalorder %s22, 1
      %p171 = por %p169, %p170
      %p172 = scmp.ne.s32.totalorder %s161, %s162
      %p173 = scmp.eq.s32.totalorder %s22, 0
      %p174 = por %p172, %p173
      %p175 = scmp.ne.s32.totalorder %s161, %s162
      %p176 = scmp.eq.s32.totalorder %s23, 1
      %p177 = por %p175, %p176
      %p179 = scmp.ne.s32.totalorder %s162, %s178
      %p180 = scmp.eq.s32.totalorder %s23, 0
      %p181 = por %p179, %p180
      %p182 = scmp.le.s32.totalorder 1, %s17
      %p183 = scmp.lt.s32.totalorder %s17, 3
      %p184 = pnand %p182, %p183
      %p185 = pneg %p184
      // Predicated region
      $region9: #{mmlp_forward.1} parent=5 // pred_check
        _
      $region10: #{mmlp_forward.1} parent=5 // pred_check_branch
        %187 = sbr.rel (%p184) target = $region12
      $region11: #{mmlp_forward.1} parent=5 // pred_region
        %s188 = ssub.s32 %s17, 1
        // Predicated region
        $region13: #{mmlp_forward.1} parent=11 // pred_check
          %p189 = pneg %p64
        $region14: #{mmlp_forward.1} parent=11 // pred_check_branch
          %191 = sbr.rel (%p189) target = $region16
        $region15: #{mmlp_forward.1} parent=11 // pred_region
          %s193 = ssub.s32 1088, 1088
          %194 = vsyncadd [#allocation3], %s193
          %s195 = sshll.u32 [#allocation2], 4
          %s196 = int_to_ptr.vmem [resolvable:$true] %s195
          %201 = dma.hbm_to_vmem [thread:$0]  %s1, 1088, %s196, [#allocation3], 64, 64, 4
        $region16: #{mmlp_forward.1} parent=11 // pred_fallthru
          _
        // Predicated region
        $region17: #{mmlp_forward.1} parent=11 // pred_check
          %p202 = pneg %p85
        $region18: #{mmlp_forward.1} parent=11 // pred_check_branch
          %204 = sbr.rel (%p202) target = $region20
        $region19: #{mmlp_forward.1} parent=11 // pred_region
          _
        $region20: #{mmlp_forward.1} parent=11 // pred_fallthru
          _
        // Predicated region
        $region21: #{mmlp_forward.1} parent=11 // pred_check
          %p205 = pneg %p106
        $region22: #{mmlp_forward.1} parent=11 // pred_check_branch
          %207 = sbr.rel (%p205) target = $region24
        $region23: #{mmlp_forward.1} parent=11 // pred_region
          _
        $region24: #{mmlp_forward.1} parent=11 // pred_fallthru
          _
        // Predicated region
        $region25: #{mmlp_forward.1} parent=11 // pred_check
          %p208 = pneg %p127
        $region26: #{mmlp_forward.1} parent=11 // pred_check_branch
          %210 = sbr.rel (%p208) target = $region28
        $region27: #{mmlp_forward.1} parent=11 // pred_region
          %s212 = ssub.s32 512, 512
          %213 = vsyncadd [#allocation6], %s212
          %s214 = sshll.u32 [#allocation5], 4
          %s215 = int_to_ptr.vmem [resolvable:$true] %s214
          %220 = dma.hbm_to_vmem [thread:$0]  %s4, 512, %s215, [#allocation6], 128, 128, 8
        $region28: #{mmlp_forward.1} parent=11 // pred_fallthru
          _
        // Predicated region
        $region29: #{mmlp_forward.1} parent=11 // pred_check
          %p221 = pneg %p148
        $region30: #{mmlp_forward.1} parent=11 // pred_check_branch
          %223 = sbr.rel (%p221) target = $region32
        $region31: #{mmlp_forward.1} parent=11 // pred_region
          _
        $region32: #{mmlp_forward.1} parent=11 // pred_fallthru
          _
      $region12: #{mmlp_forward.1} parent=5 // pred_fallthru
        _
      %p224 = scmp.lt.s32.totalorder %s17, 2
      // Predicated region
      $region33: #{mmlp_forward.1} parent=5 // pred_check
        %p225 = pneg %p224
      $region34: #{mmlp_forward.1} parent=5 // pred_check_branch
        %227 = sbr.rel (%p225) target = $region36
      $region35: #{mmlp_forward.1} parent=5 // pred_region
        // Predicated region
        $region37: #{mmlp_forward.1} parent=35 // pred_check
          %p228 = pneg %p37
        $region38: #{mmlp_forward.1} parent=35 // pred_check_branch
          %230 = sbr.rel (%p228) target = $region40
        $region39: #{mmlp_forward.1} parent=35 // pred_region
          %s231 = smul.u32 4, %s17
          %p232 = scmp.lt.s32.totalorder %s231, 7
          %s233 = scalar_select %p232, %s231, 7
          %s234 = smul.addr %s233, 2
          %s235 = smul.addr %s234, 8
          %s236 = scalar_lea.vmem %s0, %s235
          %s237 = smul.u32 4, %s17
        $region40: #{mmlp_forward.1} parent=35 // pred_fallthru
          _
      $region36: #{mmlp_forward.1} parent=5 // pred_fallthru
        _
      %p238 = scmp.le.s32.totalorder 1, %s17
      %p239 = scmp.lt.s32.totalorder %s17, 3
      %p240 = pnand %p238, %p239
      %p241 = pneg %p240
      // Predicated region
      $region41: #{mmlp_forward.1} parent=5 // pred_check
        _
      $region42: #{mmlp_forward.1} parent=5 // pred_check_branch
        %243 = sbr.rel (%p240) target = $region44
      $region43: #{mmlp_forward.1} parent=5 // pred_region
        %s244 = ssub.s32 %s17, 1
        // Predicated region
        $region45: #{mmlp_forward.1} parent=43 // pred_check
          %p245 = pneg %p64
        $region46: #{mmlp_forward.1} parent=43 // pred_check_branch
          %247 = sbr.rel (%p245) target = $region48
        $region47: #{mmlp_forward.1} parent=43 // pred_region
          %248 = dma.done [#allocation3], 1088
        $region48: #{mmlp_forward.1} parent=43 // pred_fallthru
          _
        // Predicated region
        $region49: #{mmlp_forward.1} parent=43 // pred_check
          %p249 = pneg %p127
        $region50: #{mmlp_forward.1} parent=43 // pred_check_branch
          %251 = sbr.rel (%p249) target = $region52
        $region51: #{mmlp_forward.1} parent=43 // pred_region
          %252 = dma.done [#allocation6], 512
        $region52: #{mmlp_forward.1} parent=43 // pred_fallthru
          _
        %s253 = smul.u32 4, %s22
        %p254 = scmp.lt.s32.totalorder %s253, 7
        %s255 = scalar_select %p254, %s253, 7
        %s256 = smul.addr %s255, 2
        %s257 = smul.addr %s256, 8
        %s258 = scalar_lea.vmem %s0, %s257
        %p259 = pneg %p43
        %p260 = pneg %p40
        %p261 = pneg %p64
        %p262 = pneg %p61
        %p263 = pneg %p85
        %p264 = pneg %p82
        %p265 = pneg %p106
        %p266 = pneg %p103
        %p267 = pneg %p127
        %p268 = pneg %p124
        %p269 = pneg %p148
        %p270 = pneg %p145
        %p271 = pneg %p174
        %p272 = pneg %p171
        %s273 = sand.u32 %s161, 1
        %s274 = scalar_lea.sflag [#allocation4], %s273
        %s275 = sand.u32 %s161, 1
        %s276 = smul.addr %s275, 32
        %s277 = scalar_lea.vmem [#allocation7], %s276
        %s278 = smul.u32 4, %s22
        %p279 = scmp.lt.s32.totalorder %s278, 7
        %s280 = scalar_select %p279, %s278, 7
        %s281 = smul.addr %s280, 2
        %s282 = smul.addr %s281, 8
        %s283 = scalar_lea.vmem %s0, %s282
        %s284 = smul.u32 4, %s22
        %s285 = smul.u32 4, %s22
        %v287 = vld [vmem:[%s5] sm:$0xff]
        %v288 = vld [vmem:[%s5 + $0x8] sm:$0xff]
        %v289 = vld [vmem:[%s283] sm:$0xff]
        %v290 = vld [vmem:[%s283 + $0x8] sm:$0xff]
        %v291 = vld [vmem:[%s283 + $0x10] sm:$0xff]
        %v292 = vld [vmem:[%s283 + $0x18] sm:$0xff]
        %v293 = vld [vmem:[%s283 + $0x20] sm:$0xff]
        %v294 = vld [vmem:[%s283 + $0x28] sm:$0xff]
        %v295 = vld [vmem:[%s283 + $0x30] sm:$0xff]
        %v296 = vld [vmem:[%s283 + $0x38] sm:$0xff]
        %v297 = vpack.c.bf16 %v291, %v289
        %v298 = vpack.c.bf16 %v292, %v290
        %v299 = vpack.c.bf16 %v295, %v293
        %v300 = vpack.c.bf16 %v296, %v294
        %v301 = vld [vmem:[#allocation2] sm:$0xf]
        %v302 = vld [vmem:[#allocation2 + $0x4] sm:$0xf]
        %v303 = vld [vmem:[#allocation2 + $0x8] sm:$0xf]
        %v304 = vld [vmem:[#allocation2 + $0xc] sm:$0xf]
        %v305 = vld [vmem:[#allocation2 + $0x10] sm:$0xf]
        %v306 = vld [vmem:[#allocation2 + $0x14] sm:$0xf]
        %v307 = vld [vmem:[#allocation2 + $0x18] sm:$0xf]
        %v308 = vld [vmem:[#allocation2 + $0x1c] sm:$0xf]
        %v309 = vld [vmem:[#allocation2 + $0x20] sm:$0xf]
        %v310 = vld [vmem:[#allocation2 + $0x24] sm:$0xf]
        %v311 = vld [vmem:[#allocation2 + $0x28] sm:$0xf]
        %v312 = vld [vmem:[#allocation2 + $0x2c] sm:$0xf]
        %v313 = vld [vmem:[#allocation2 + $0x30] sm:$0xf]
        %v314 = vld [vmem:[#allocation2 + $0x34] sm:$0xf]
        %v315 = vld [vmem:[#allocation2 + $0x38] sm:$0xf]
        %v316 = vld [vmem:[#allocation2 + $0x3c] sm:$0xf]
        %v317 = vld [vmem:[#allocation2 + $0x40] sm:$0x1]
        %v318 = vlaneseq
        %v319 = vshrl.u32 %v318, 7
        %v320 = vsub.s32 0, %v319
        %v321 = vrot.slane %v287, %v320
        %v339 = vunpack.c.l.b16 %v301
        %v340 = vunpack.c.l.b16 %v302
        %v341 = vunpack.c.l.b16 %v303
        %v342 = vunpack.c.l.b16 %v304
        %v343 = vunpack.c.l.b16 %v305
        %v344 = vunpack.c.l.b16 %v306
        %v345 = vunpack.c.l.b16 %v307
        %v346 = vunpack.c.l.b16 %v308
        %v347 = vunpack.c.l.b16 %v309
        %v348 = vunpack.c.l.b16 %v310
        %v349 = vunpack.c.l.b16 %v311
        %v350 = vunpack.c.l.b16 %v312
        %v351 = vunpack.c.l.b16 %v313
        %v352 = vunpack.c.l.b16 %v314
        %v353 = vunpack.c.l.b16 %v315
        %v354 = vunpack.c.l.b16 %v316
        %v355 = vunpack.c.l.b16 %v317
        %v356 = vpack.c.b16 %v340, %v339
        %v357 = vpack.c.b16 %v342, %v341
        %v358 = vpack.c.b16 %v344, %v343
        %v359 = vpack.c.b16 %v346, %v345
        %v360 = vpack.c.b16 %v348, %v347
        %v361 = vpack.c.b16 %v350, %v349
        %v362 = vpack.c.b16 %v352, %v351
        %v363 = vpack.c.b16 %v354, %v353
        %v364 = vpack.c.b16 %v355, %v355
        %vm373 = vcmask 15360
        %v375 = vsel %vm373, %v298, 0
        %v378 = vsel %vm373, %v300, 0
        %vm380 = vcmask 1040384
        %v382 = vsel %vm380, %v364, 0
        %384 = vmatprep.subr.bf16.mxu0 0
        %385 = vmatpush1.bf16.msra.mxu0 %v363
        %386 = vmatprep.subr.bf16.mxu0 0
        %387 = vmatpush1.bf16.msra.mxu0 %v362
        %388 = vmatprep.subr.bf16.mxu0 0
        %389 = vmatpush1.bf16.msra.mxu0 %v361
        %390 = vmatprep.subr.bf16.mxu0 0
        %391 = vmatpush1.bf16.msra.mxu0 %v360
        %392 = vmatprep.subr.bf16.mxu0 0
        %393 = vmatpush1.bf16.msra.mxu0 %v359
        %394 = vmatprep.subr.bf16.mxu0 0
        %395 = vmatpush1.bf16.msra.mxu0 %v358
        %396 = vmatprep.subr.bf16.mxu0 0
        %397 = vmatpush1.bf16.msra.mxu0 %v357
        %398 = vmatprep.subr.bf16.mxu0 0
        %399 = vmatpush1.bf16.msra.mxu0 %v356
        %400 = vmatprep.subr.bf16.mxu0 0
        %401 = vmatpush2.bf16.msra.mxu0 0
        %402 = vmatprep.subr.bf16.mxu0 0
        %403 = vmatpush2.bf16.msra.mxu0 0
        %404 = vmatprep.subr.bf16.mxu0 0
        %405 = vmatpush2.bf16.msra.mxu0 0
        %406 = vmatprep.subr.bf16.mxu0 0
        %407 = vmatpush2.bf16.msra.mxu0 0
        %408 = vmatprep.subr.bf16.mxu0 0
        %409 = vmatpush2.bf16.msra.mxu0 0
        %410 = vmatprep.subr.bf16.mxu0 0
        %411 = vmatpush2.bf16.msra.mxu0 0
        %412 = vmatprep.subr.bf16.mxu0 0
        %413 = vmatpush2.bf16.msra.mxu0 0
        %414 = vmatprep.subr.bf16.mxu0 0
        %415 = vmatpush2.bf16.msra.mxu0 %v382
        %416 = vmatprep.mubr.bf16.mxu0 %v375
        %417 = vmatmul.mubr.bf16.gmra.mxu0 %v297
        %v418 = vpop.f32.mrf.mxu0
        %v419 = vadd.f32 %v321, %v418
        %v420 = vpop.f32.mrf.mxu0
        %v421 = vpop.f32.mrf.mxu0
        %v422 = vadd.f32 %v321, %v421
        %v423 = vpop.f32.mrf.mxu0
        %424 = vmatprep.mubr.bf16.mxu0 %v378
        %425 = vmatmul.mubr.bf16.gmra.mxu0 %v299
        %v426 = vpop.f32.mrf.mxu0
        %v427 = vadd.f32 %v321, %v426
        %v428 = vpop.f32.mrf.mxu0
        %v429 = vpop.f32.mrf.mxu0
        %v430 = vadd.f32 %v321, %v429
        %v431 = vpop.f32.mrf.mxu0
        %432 = vdwg.mxu0
        %v433 = vxor.u32 %v419, 2147483648
        %v434 = vxor.u32 %v422, 2147483648
        %v435 = vxor.u32 %v427, 2147483648
        %v436 = vxor.u32 %v430, 2147483648
        %v437 = vmul.f32 %v433, 1.442695
        %v438 = vpow.pop %v437
        %v439 = vmul.f32 %v434, 1.442695
        %v440 = vpow.pop %v439
        %v441 = vmul.f32 %v435, 1.442695
        %v442 = vpow.pop %v441
        %v443 = vmul.f32 %v436, 1.442695
        %v444 = vpow.pop %v443
        %v445 = vadd.f32 %v438, 1.0
        %v446 = vadd.f32 %v440, 1.0
        %v447 = vadd.f32 %v442, 1.0
        %v448 = vadd.f32 %v444, 1.0
        %v449 = vrcp.pop %v445
        %v450 = vmul.f32 1.0, %v449
        %v451 = vrcp.pop %v446
        %v452 = vmul.f32 1.0, %v451
        %v453 = vrcp.pop %v447
        %v454 = vmul.f32 1.0, %v453
        %v455 = vrcp.pop %v448
        %v456 = vmul.f32 1.0, %v455
        %v457 = vmul.f32 %v419, %v450
        %v458 = vmul.f32 %v422, %v452
        %v459 = vmul.f32 %v427, %v454
        %v460 = vmul.f32 %v430, %v456
        %v461 = vpack.c.bf16 %v458, %v457
        %v462 = vpack.c.bf16 %v460, %v459
        %v463 = vld [vmem:[%s2] sm:$0xf]
        %v464 = vld [vmem:[%s2 + $0x4] sm:$0xf]
        %v465 = vld [vmem:[%s2 + $0x8] sm:$0xf]
        %v466 = vld [vmem:[%s2 + $0xc] sm:$0xf]
        %v467 = vld [vmem:[%s2 + $0x10] sm:$0xf]
        %v468 = vld [vmem:[%s2 + $0x14] sm:$0xf]
        %v469 = vld [vmem:[%s2 + $0x18] sm:$0xf]
        %v470 = vld [vmem:[%s2 + $0x1c] sm:$0xf]
        %v471 = vld [vmem:[%s2 + $0x20] sm:$0xf]
        %v472 = vld [vmem:[%s2 + $0x24] sm:$0xf]
        %v473 = vld [vmem:[%s2 + $0x28] sm:$0xf]
        %v474 = vld [vmem:[%s2 + $0x2c] sm:$0xf]
        %v475 = vld [vmem:[%s2 + $0x30] sm:$0xf]
        %v476 = vld [vmem:[%s2 + $0x34] sm:$0xf]
        %v477 = vld [vmem:[%s2 + $0x38] sm:$0xf]
        %v478 = vld [vmem:[%s2 + $0x3c] sm:$0xf]
        %v479 = vlaneseq
        %v480 = vshrl.u32 %v479, 7
        %v481 = vsub.s32 1, %v480
        %v482 = vrot.slane %v287, %v481
        %v499 = vunpack.c.l.b16 %v463
        %v500 = vunpack.c.l.b16 %v464
        %v501 = vunpack.c.l.b16 %v465
        %v502 = vunpack.c.l.b16 %v466
        %v503 = vunpack.c.l.b16 %v467
        %v504 = vunpack.c.l.b16 %v468
        %v505 = vunpack.c.l.b16 %v469
        %v506 = vunpack.c.l.b16 %v470
        %v507 = vunpack.c.l.b16 %v471
        %v508 = vunpack.c.l.b16 %v472
        %v509 = vunpack.c.l.b16 %v473
        %v510 = vunpack.c.l.b16 %v474
        %v511 = vunpack.c.l.b16 %v475
        %v512 = vunpack.c.l.b16 %v476
        %v513 = vunpack.c.l.b16 %v477
        %v514 = vunpack.c.l.b16 %v478
        %v515 = vpack.c.b16 %v500, %v499
        %v516 = vpack.c.b16 %v502, %v501
        %v517 = vpack.c.b16 %v504, %v503
        %v518 = vpack.c.b16 %v506, %v505
        %v519 = vpack.c.b16 %v508, %v507
        %v520 = vpack.c.b16 %v510, %v509
        %v521 = vpack.c.b16 %v512, %v511
        %v522 = vpack.c.b16 %v514, %v513
        %531 = vmatprep.subr.bf16.mxu0 0
        %532 = vmatpush1.bf16.msra.mxu0 %v522
        %533 = vmatprep.subr.bf16.mxu0 0
        %534 = vmatpush1.bf16.msra.mxu0 %v521
        %535 = vmatprep.subr.bf16.mxu0 0
        %536 = vmatpush1.bf16.msra.mxu0 %v520
        %537 = vmatprep.subr.bf16.mxu0 0
        %538 = vmatpush1.bf16.msra.mxu0 %v519
        %539 = vmatprep.subr.bf16.mxu0 0
        %540 = vmatpush1.bf16.msra.mxu0 %v518
        %541 = vmatprep.subr.bf16.mxu0 0
        %542 = vmatpush1.bf16.msra.mxu0 %v517
        %543 = vmatprep.subr.bf16.mxu0 0
        %544 = vmatpush1.bf16.msra.mxu0 %v516
        %545 = vmatprep.subr.bf16.mxu0 0
        %546 = vmatpush1.bf16.msra.mxu0 %v515
        %547 = vmatprep.subr.bf16.mxu0 0
        %548 = vmatpush2.bf16.msra.mxu0 0
        %549 = vmatprep.subr.bf16.mxu0 0
        %550 = vmatpush2.bf16.msra.mxu0 0
        %551 = vmatprep.subr.bf16.mxu0 0
        %552 = vmatpush2.bf16.msra.mxu0 0
        %553 = vmatprep.subr.bf16.mxu0 0
        %554 = vmatpush2.bf16.msra.mxu0 0
        %555 = vmatprep.subr.bf16.mxu0 0
        %556 = vmatpush2.bf16.msra.mxu0 0
        %557 = vmatprep.subr.bf16.mxu0 0
        %558 = vmatpush2.bf16.msra.mxu0 0
        %559 = vmatprep.subr.bf16.mxu0 0
        %560 = vmatpush2.bf16.msra.mxu0 0
        %561 = vmatprep.subr.bf16.mxu0 0
        %562 = vmatpush2.bf16.msra.mxu0 0
        %563 = vmatprep.mubr.bf16.mxu0 0
        %564 = vmatmul.mubr.bf16.gmra.mxu0 %v461
        %v565 = vpop.f32.mrf.mxu0
        %v566 = vadd.f32 %v482, %v565
        %v567 = vpop.f32.mrf.mxu0
        %v568 = vpop.f32.mrf.mxu0
        %v569 = vadd.f32 %v482, %v568
        %v570 = vpop.f32.mrf.mxu0
        %571 = vmatprep.mubr.bf16.mxu0 0
        %572 = vmatmul.mubr.bf16.gmra.mxu0 %v462
        %v573 = vpop.f32.mrf.mxu0
        %v574 = vadd.f32 %v482, %v573
        %v575 = vpop.f32.mrf.mxu0
        %v576 = vpop.f32.mrf.mxu0
        %v577 = vadd.f32 %v482, %v576
        %v578 = vpop.f32.mrf.mxu0
        %579 = vdwg.mxu0
        %v580 = vxor.u32 %v566, 2147483648
        %v581 = vxor.u32 %v569, 2147483648
        %v582 = vxor.u32 %v574, 2147483648
        %v583 = vxor.u32 %v577, 2147483648
        %v584 = vmul.f32 %v580, 1.442695
        %v585 = vpow.pop %v584
        %v586 = vmul.f32 %v581, 1.442695
        %v587 = vpow.pop %v586
        %v588 = vmul.f32 %v582, 1.442695
        %v589 = vpow.pop %v588
        %v590 = vmul.f32 %v583, 1.442695
        %v591 = vpow.pop %v590
        %v592 = vadd.f32 %v585, 1.0
        %v593 = vadd.f32 %v587, 1.0
        %v594 = vadd.f32 %v589, 1.0
        %v595 = vadd.f32 %v591, 1.0
        %v596 = vrcp.pop %v592
        %v597 = vmul.f32 1.0, %v596
        %v598 = vrcp.pop %v593
        %v599 = vmul.f32 1.0, %v598
        %v600 = vrcp.pop %v594
        %v601 = vmul.f32 1.0, %v600
        %v602 = vrcp.pop %v595
        %v603 = vmul.f32 1.0, %v602
        %v604 = vmul.f32 %v566, %v597
        %v605 = vmul.f32 %v569, %v599
        %v606 = vmul.f32 %v574, %v601
        %v607 = vmul.f32 %v577, %v603
        %v608 = vpack.c.bf16 %v605, %v604
        %v609 = vpack.c.bf16 %v607, %v606
        %v610 = vld [vmem:[%s3] sm:$0xf]
        %v611 = vld [vmem:[%s3 + $0x4] sm:$0xf]
        %v612 = vld [vmem:[%s3 + $0x8] sm:$0xf]
        %v613 = vld [vmem:[%s3 + $0xc] sm:$0xf]
        %v614 = vld [vmem:[%s3 + $0x10] sm:$0xf]
        %v615 = vld [vmem:[%s3 + $0x14] sm:$0xf]
        %v616 = vld [vmem:[%s3 + $0x18] sm:$0xf]
        %v617 = vld [vmem:[%s3 + $0x1c] sm:$0xf]
        %v618 = vlaneseq
        %v619 = vshrl.u32 %v618, 7
        %v620 = vsub.s32 2, %v619
        %v621 = vrot.slane %v287, %v620
        %v630 = vunpack.c.l.b16 %v610
        %v631 = vunpack.c.l.b16 %v611
        %v632 = vunpack.c.l.b16 %v612
        %v633 = vunpack.c.l.b16 %v613
        %v634 = vunpack.c.l.b16 %v614
        %v635 = vunpack.c.l.b16 %v615
        %v636 = vunpack.c.l.b16 %v616
        %v637 = vunpack.c.l.b16 %v617
        %v638 = vpack.c.b16 %v631, %v630
        %v639 = vpack.c.b16 %v633, %v632
        %v640 = vpack.c.b16 %v635, %v634
        %v641 = vpack.c.b16 %v637, %v636
        %vm646 = vcmask 523264
        %v648 = vsel %vm646, %v608, 0
        %v651 = vsel %vm646, %v609, 0
        %653 = vmatprep.subr.bf16.mxu0 0
        %654 = vmatpush1.bf16.msra.mxu0 0
        %655 = vmatprep.subr.bf16.mxu0 0
        %656 = vmatpush1.bf16.msra.mxu0 0
        %657 = vmatprep.subr.bf16.mxu0 0
        %658 = vmatpush1.bf16.msra.mxu0 0
        %659 = vmatprep.subr.bf16.mxu0 0
        %660 = vmatpush1.bf16.msra.mxu0 0
        %661 = vmatprep.subr.bf16.mxu0 0
        %662 = vmatpush1.bf16.msra.mxu0 %v641
        %663 = vmatprep.subr.bf16.mxu0 0
        %664 = vmatpush1.bf16.msra.mxu0 %v640
        %665 = vmatprep.subr.bf16.mxu0 0
        %666 = vmatpush1.bf16.msra.mxu0 %v639
        %667 = vmatprep.subr.bf16.mxu0 0
        %668 = vmatpush1.bf16.msra.mxu0 %v638
        %669 = vmatprep.subr.bf16.mxu0 0
        %670 = vmatpush2.bf16.msra.mxu0 0
        %671 = vmatprep.subr.bf16.mxu0 0
        %672 = vmatpush2.bf16.msra.mxu0 0
        %673 = vmatprep.subr.bf16.mxu0 0
        %674 = vmatpush2.bf16.msra.mxu0 0
        %675 = vmatprep.subr.bf16.mxu0 0
        %676 = vmatpush2.bf16.msra.mxu0 0
        %677 = vmatprep.subr.bf16.mxu0 0
        %678 = vmatpush2.bf16.msra.mxu0 0
        %679 = vmatprep.subr.bf16.mxu0 0
        %680 = vmatpush2.bf16.msra.mxu0 0
        %681 = vmatprep.subr.bf16.mxu0 0
        %682 = vmatpush2.bf16.msra.mxu0 0
        %683 = vmatprep.subr.bf16.mxu0 0
        %684 = vmatpush2.bf16.msra.mxu0 0
        %685 = vmatprep.mubr.bf16.mxu0 0
        %686 = vmatmul.mubr.bf16.gmra.mxu0 %v648
        %v687 = vpop.f32.mrf.mxu0
        %v688 = vadd.f32 %v621, %v687
        %v689 = vpop.f32.mrf.mxu0
        %v690 = vpop.f32.mrf.mxu0
        %v691 = vadd.f32 %v621, %v690
        %v692 = vpop.f32.mrf.mxu0
        %693 = vmatprep.mubr.bf16.mxu0 0
        %694 = vmatmul.mubr.bf16.gmra.mxu0 %v651
        %v695 = vpop.f32.mrf.mxu0
        %v696 = vadd.f32 %v621, %v695
        %v697 = vpop.f32.mrf.mxu0
        %v698 = vpop.f32.mrf.mxu0
        %v699 = vadd.f32 %v621, %v698
        %v700 = vpop.f32.mrf.mxu0
        %701 = vdwg.mxu0
        %v702 = vxor.u32 %v688, 2147483648
        %v703 = vxor.u32 %v691, 2147483648
        %v704 = vxor.u32 %v696, 2147483648
        %v705 = vxor.u32 %v699, 2147483648
        %v706 = vmul.f32 %v702, 1.442695
        %v707 = vpow.pop %v706
        %v708 = vmul.f32 %v703, 1.442695
        %v709 = vpow.pop %v708
        %v710 = vmul.f32 %v704, 1.442695
        %v711 = vpow.pop %v710
        %v712 = vmul.f32 %v705, 1.442695
        %v713 = vpow.pop %v712
        %v714 = vadd.f32 %v707, 1.0
        %v715 = vadd.f32 %v709, 1.0
        %v716 = vadd.f32 %v711, 1.0
        %v717 = vadd.f32 %v713, 1.0
        %v718 = vrcp.pop %v714
        %v719 = vmul.f32 1.0, %v718
        %v720 = vrcp.pop %v715
        %v721 = vmul.f32 1.0, %v720
        %v722 = vrcp.pop %v716
        %v723 = vmul.f32 1.0, %v722
        %v724 = vrcp.pop %v717
        %v725 = vmul.f32 1.0, %v724
        %v726 = vmul.f32 %v688, %v719
        %v727 = vmul.f32 %v691, %v721
        %v728 = vmul.f32 %v696, %v723
        %v729 = vmul.f32 %v699, %v725
        %v730 = vpack.c.bf16 %v727, %v726
        %v731 = vpack.c.bf16 %v729, %v728
        %v732 = vld [vmem:[#allocation5] sm:$0xff]
        %v733 = vld [vmem:[#allocation5 + $0x8] sm:$0xff]
        %v734 = vld [vmem:[#allocation5 + $0x10] sm:$0xff]
        %v735 = vld [vmem:[#allocation5 + $0x18] sm:$0xff]
        %v736 = vlaneseq
        %v737 = vshrl.u32 %v736, 7
        %v738 = vsub.s32 3, %v737
        %v739 = vrot.slane %v287, %v738
        %v740 = vlaneseq
        %v741 = vshrl.u32 %v740, 7
        %v742 = vsub.s32 3, %v741
        %v743 = vrot.slane %v288, %v742
        %v748 = vunpack.c.l.b16 %v732
        %v749 = vunpack.c.h.b16 %v732
        %v750 = vunpack.c.l.b16 %v733
        %v751 = vunpack.c.h.b16 %v733
        %v752 = vunpack.c.l.b16 %v734
        %v753 = vunpack.c.h.b16 %v734
        %v754 = vunpack.c.l.b16 %v735
        %v755 = vunpack.c.h.b16 %v735
        %v756 = vpack.c.b16 %v750, %v748
        %v757 = vpack.c.b16 %v751, %v749
        %v758 = vpack.c.b16 %v754, %v752
        %v759 = vpack.c.b16 %v755, %v753
        %vm764 = vcmask 261120
        %v766 = vsel %vm764, %v730, 0
        %v769 = vsel %vm764, %v731, 0
        %771 = vmatprep.subr.bf16.mxu0 0
        %772 = vmatpush1.bf16.msra.mxu0 0
        %773 = vmatprep.subr.bf16.mxu0 0
        %774 = vmatpush1.bf16.msra.mxu0 0
        %775 = vmatprep.subr.bf16.mxu0 0
        %776 = vmatpush1.bf16.msra.mxu0 0
        %777 = vmatprep.subr.bf16.mxu0 0
        %778 = vmatpush1.bf16.msra.mxu0 0
        %779 = vmatprep.subr.bf16.mxu0 0
        %780 = vmatpush1.bf16.msra.mxu0 0
        %781 = vmatprep.subr.bf16.mxu0 0
        %782 = vmatpush1.bf16.msra.mxu0 0
        %783 = vmatprep.subr.bf16.mxu0 %v759
        %784 = vmatpush1.bf16.msra.mxu0 %v758
        %785 = vmatprep.subr.bf16.mxu0 %v757
        %786 = vmatpush1.bf16.msra.mxu0 %v756
        %787 = vmatprep.subr.bf16.mxu0 0
        %788 = vmatpush2.bf16.msra.mxu0 0
        %789 = vmatprep.subr.bf16.mxu0 0
        %790 = vmatpush2.bf16.msra.mxu0 0
        %791 = vmatprep.subr.bf16.mxu0 0
        %792 = vmatpush2.bf16.msra.mxu0 0
        %793 = vmatprep.subr.bf16.mxu0 0
        %794 = vmatpush2.bf16.msra.mxu0 0
        %795 = vmatprep.subr.bf16.mxu0 0
        %796 = vmatpush2.bf16.msra.mxu0 0
        %797 = vmatprep.subr.bf16.mxu0 0
        %798 = vmatpush2.bf16.msra.mxu0 0
        %799 = vmatprep.subr.bf16.mxu0 0
        %800 = vmatpush2.bf16.msra.mxu0 0
        %801 = vmatprep.subr.bf16.mxu0 0
        %802 = vmatpush2.bf16.msra.mxu0 0
        %803 = vmatprep.mubr.bf16.mxu0 0
        %804 = vmatmul.mubr.bf16.gmra.mxu0 %v766
        %v805 = vpop.f32.mrf.mxu0
        %v806 = vadd.f32 %v739, %v805
        %v807 = vpop.f32.mrf.mxu0
        %v808 = vadd.f32 %v743, %v807
        %v809 = vpop.f32.mrf.mxu0
        %v810 = vadd.f32 %v739, %v809
        %v811 = vpop.f32.mrf.mxu0
        %v812 = vadd.f32 %v743, %v811
        %813 = vmatprep.mubr.bf16.mxu0 0
        %814 = vmatmul.mubr.bf16.gmra.mxu0 %v769
        %v815 = vpop.f32.mrf.mxu0
        %v816 = vadd.f32 %v739, %v815
        %v817 = vpop.f32.mrf.mxu0
        %v818 = vadd.f32 %v743, %v817
        %v819 = vpop.f32.mrf.mxu0
        %v820 = vadd.f32 %v739, %v819
        %v821 = vpop.f32.mrf.mxu0
        %v822 = vadd.f32 %v743, %v821
        %823 = vdwg.mxu0
        %v824 = vlaneseq
        %v825 = vand.u32 %v824, 127
        %v826 = vadd.s32 %v825, 128
        %vm827 = vcmp.ge.s32.totalorder %v826, 130
        %vm828 = vcmp.lt.s32.totalorder %v826, 135
        %vm829 = vmand %vm827, %vm828
        %v830 = vxor.u32 %v808, 2147483648
        %v831 = vxor.u32 %v812, 2147483648
        %v832 = vxor.u32 %v818, 2147483648
        %v833 = vxor.u32 %v822, 2147483648
        %v834 = vmul.f32 %v830, 1.442695
        %v835 = vpow.pop %v834
        %v836 = vmul.f32 %v831, 1.442695
        %v837 = vpow.pop %v836
        %v838 = vmul.f32 %v832, 1.442695
        %v839 = vpow.pop %v838
        %v840 = vmul.f32 %v833, 1.442695
        %v841 = vpow.pop %v840
        %v842 = vadd.f32 %v835, 1.0
        %v843 = vadd.f32 %v837, 1.0
        %v844 = vadd.f32 %v839, 1.0
        %v845 = vadd.f32 %v841, 1.0
        %v846 = vrcp.pop %v842
        %v847 = vmul.f32 1.0, %v846
        %v848 = vrcp.pop %v843
        %v849 = vmul.f32 1.0, %v848
        %v850 = vrcp.pop %v844
        %v851 = vmul.f32 1.0, %v850
        %v852 = vrcp.pop %v845
        %v853 = vmul.f32 1.0, %v852
        %v854 = vsel %vm829, %v847, %v808
        %v855 = vsel %vm829, %v849, %v812
        %v856 = vsel %vm829, %v851, %v818
        %v857 = vsel %vm829, %v853, %v822
        %v858 = vpack.c.bf16 %v810, %v806
        %v859 = vpack.c.bf16 %v820, %v816
        %v862 = vunpack.c.l.b16 %v858
        %v863 = vunpack.c.h.b16 %v858
        %v864 = vunpack.c.l.b16 %v859
        %v865 = vunpack.c.h.b16 %v859
        %v866 = vpack.c.b16 %v862, %v862
        %v867 = vpack.c.b16 %v863, %v863
        %v868 = vpack.c.b16 %v864, %v864
        %v869 = vpack.c.b16 %v865, %v865
        %874 = vst [vmem:[%s277] sm:$0xf] %v866
        %875 = vst [vmem:[%s277 + $0x8] sm:$0xf] %v867
        %876 = vst [vmem:[%s277 + $0x10] sm:$0xf] %v868
        %877 = vst [vmem:[%s277 + $0x18] sm:$0xf] %v869
        %v878 = vpack.c.bf16 %v855, %v854
        %v879 = vpack.c.bf16 %v857, %v856
        %v882 = vunpack.c.l.b16 %v878
        %v883 = vunpack.c.h.b16 %v878
        %v884 = vunpack.c.l.b16 %v879
        %v885 = vunpack.c.h.b16 %v879
        %v886 = vpack.c.b16 %v882, %v882
        %v887 = vpack.c.b16 %v883, %v883
        %v888 = vpack.c.b16 %v884, %v884
        %v889 = vpack.c.b16 %v885, %v885
        %894 = vst [vmem:[%s277 + $0x4] sm:$0xf] %v886
        %895 = vst [vmem:[%s277 + $0xc] sm:$0xf] %v887
        %896 = vst [vmem:[%s277 + $0x14] sm:$0xf] %v888
        %897 = vst [vmem:[%s277 + $0x1c] sm:$0xf] %v889
        %s898 = sand.u32 %s161, 1
        %s899 = scalar_lea.sflag [#allocation4], %s898
        %s900 = sand.u32 %s161, 1
        %s901 = smul.addr %s900, 32
        %s902 = scalar_lea.vmem [#allocation7], %s901
        // Predicated region
        $region53: #{mmlp_forward.1} parent=43 // pred_check
          %p903 = pneg %p171
        $region54: #{mmlp_forward.1} parent=43 // pred_check_branch
          %905 = sbr.rel (%p903) target = $region56
        $region55: #{mmlp_forward.1} parent=43 // pred_region
          %s906 = smul.u32 4, %s22
          %s908 = ssub.s32 512, 512
          %909 = vsyncadd %s899, %s908
          %s910 = smul.addr %s906, 2
          %s911 = smul.addr %s910, 64
          %s912 = scalar_lea.hbm %s6, %s911
          %s913 = sshll.u32 %s902, 4
          %s914 = int_to_ptr.vmem [resolvable:$true] %s913
          %919 = dma.vmem_to_hbm [thread:$0]  %s914, 512, %s912, %s899, 128, 128, 8
        $region56: #{mmlp_forward.1} parent=43 // pred_fallthru
          _
      $region44: #{mmlp_forward.1} parent=5 // pred_fallthru
        _
      %p920 = scmp.le.s32.totalorder 2, %s17
      // Predicated region
      $region57: #{mmlp_forward.1} parent=5 // pred_check
        %p921 = pneg %p920
      $region58: #{mmlp_forward.1} parent=5 // pred_check_branch
        %923 = sbr.rel (%p921) target = $region60
      $region59: #{mmlp_forward.1} parent=5 // pred_region
        %s924 = ssub.s32 %s17, 2
        // Predicated region
        $region61: #{mmlp_forward.1} parent=59 // pred_check
          %p925 = pneg %p177
        $region62: #{mmlp_forward.1} parent=59 // pred_check_branch
          %927 = sbr.rel (%p925) target = $region64
        $region63: #{mmlp_forward.1} parent=59 // pred_region
          %s928 = sand.u32 %s162, 1
          %s929 = scalar_lea.sflag [#allocation4], %s928
          %s930 = sand.u32 %s162, 1
          %s931 = smul.addr %s930, 32
          %s932 = scalar_lea.vmem [#allocation7], %s931
          %933 = dma.done %s929, 512
        $region64: #{mmlp_forward.1} parent=59 // pred_fallthru
          _
      $region60: #{mmlp_forward.1} parent=5 // pred_fallthru
        _
    $region6: #{mmlp_forward.1} parent=1 // loop_footer
      %s21 = sadd.s32 1, %s17
    $region7: #{mmlp_forward.1} parent=1 // loop_footer_branch
      %16 = sbr.rel target = $region3
    $region8: #{mmlp_forward.1} parent=1 // loop_exit
      _
    %934 = vsyncpa [#allocation3], 1
    %s935 = scalar_lea.sflag [#allocation3], 1
    %936 = vsyncpa %s935, 1
    %937 = vsyncpa [#allocation6], 1
    %938 = vsyncpa [#allocation4], 1
    %s939 = scalar_lea.sflag [#allocation4], 1
    %940 = vsyncpa %s939, 1

</llo_original>
